<compile_context>
chip_gen: v7x
topology: tpu7x:2x2x1
jax: 0.10.0
libtpu: 0.0.40
codegen_flags: <defaults>
</compile_context>

<pallas_src>
import math
import jax
import jax.numpy as jnp
from jax import lax
from jax.experimental import pallas as pl
from jax.experimental.pallas import tpu as pltpu

HIDDEN_SIZE = 24
INPUT_SIZE = 8
NUM_CLASSES = 10
NUM_LAYERS = 1  # kernel implements the single-layer case of the module


def rnn_kernel(x_ref, wih_ref, whh_ref, b_ref, wfc_ref, bfc_ref, o_ref):
    """Single invocation: whole sequence + all weights resident in VMEM.

    x_ref   : (B, T, I)  input, batch_first (PyTorch layout, no transpose)
    wih_ref : (I, H)     input->hidden weights (pre-transposed, f32)
    whh_ref : (H, H)     hidden->hidden weights (pre-transposed, f32)
    b_ref   : (1, H)     b_ih + b_hh combined (f32)
    wfc_ref : (H, C)     fc weights (pre-transposed, f32)
    bfc_ref : (1, C)     fc bias (f32)
    o_ref   : (B, C)     logits (f32)
    """
    B, T, I = x_ref.shape
    H = whh_ref.shape[0]

    # Cast weights to bf16 once (off the serial chain): single native MXU
    # pass per dot, f32 accumulation via preferred_element_type.
    wih = wih_ref[...].astype(jnp.bfloat16)
    whh = whh_ref[...].astype(jnp.bfloat16)
    wfc = wfc_ref[...].astype(jnp.bfloat16)
    b = b_ref[...]  # f32

    # One batched input projection for every (batch, time) row.
    # (B,T,I) -> (B*T,I) merges only sublane-tile-aligned major dims.
    x2d = x_ref[...].reshape(B * T, I).astype(jnp.bfloat16)
    xp = jnp.dot(x2d, wih, preferred_element_type=jnp.float32) + b  # (B*T, H)
    xp = xp.reshape(B, T, H)

    # Serial recurrence, fully unrolled (T static). h0 == 0, so step 0 is just
    # tanh of the projection; each later step is one bf16 MXU pass + f32 tanh.
    h = jnp.tanh(xp[:, 0, :])  # (B, H) f32
    for t in range(1, T):
        hw = jnp.dot(h.astype(jnp.bfloat16), whh,
                     preferred_element_type=jnp.float32)
        h = jnp.tanh(xp[:, t, :] + hw)

    logits = jnp.dot(h.astype(jnp.bfloat16), wfc,
                     preferred_element_type=jnp.float32) + bfc_ref[...]
    o_ref[...] = logits.astype(o_ref.dtype)


def rnn_forward(x, params):
    """x: (batch, seq, input_size) float32 -> logits (batch, num_classes)."""
    w_ih_t, w_hh_t, b_comb, w_fc_t, b_fc = params
    B, T, I = x.shape
    C = w_fc_t.shape[1]

    vmem_spec = pl.BlockSpec(memory_space=pltpu.MemorySpace.VMEM)

    return pl.pallas_call(
        rnn_kernel,
        out_shape=jax.ShapeDtypeStruct((B, C), jnp.float32),
        in_specs=[vmem_spec] * 6,
        out_specs=vmem_spec,
    )(x, w_ih_t, w_hh_t, b_comb, w_fc_t, b_fc)


def init_params(key, input_size, hidden_size, num_classes):
    """Deterministic init mimicking PyTorch's uniform(-1/sqrt(fan), 1/sqrt(fan))."""
    k1, k2, k3, k4, k5, k6 = jax.random.split(key, 6)
    bound_rnn = 1.0 / math.sqrt(hidden_size)
    w_ih = jax.random.uniform(k1, (hidden_size, input_size), jnp.float32,
                              -bound_rnn, bound_rnn)
    w_hh = jax.random.uniform(k2, (hidden_size, hidden_size), jnp.float32,
                              -bound_rnn, bound_rnn)
    b_ih = jax.random.uniform(k3, (hidden_size,), jnp.float32, -bound_rnn, bound_rnn)
    b_hh = jax.random.uniform(k4, (hidden_size,), jnp.float32, -bound_rnn, bound_rnn)

    bound_fc = 1.0 / math.sqrt(hidden_size)
    w_fc = jax.random.uniform(k5, (num_classes, hidden_size), jnp.float32,
                              -bound_fc, bound_fc)
    b_fc = jax.random.uniform(k6, (num_classes,), jnp.float32, -bound_fc, bound_fc)

    # Pre-transpose for x @ W layout; combine the two RNN biases.
    return (
        w_ih.T,                                 # (I, H)
        w_hh.T,                                 # (H, H)
        (b_ih + b_hh).reshape(1, hidden_size),  # (1, H)
        w_fc.T,                                 # (H, C)
        b_fc.reshape(1, num_classes),           # (1, C)
    )


def reference_forward(x, params):
    """Pure-JAX f32 reference matching nn.RNN(tanh) + fc on last timestep."""
    w_ih_t, w_hh_t, b_comb, w_fc_t, b_fc = params
    B = x.shape[0]
    H = w_ih_t.shape[1]
    hi = lax.Precision.HIGHEST

    def step(h, x_t):
        h_new = jnp.tanh(jnp.dot(x_t, w_ih_t, precision=hi)
                         + jnp.dot(h, w_hh_t, precision=hi) + b_comb)
        return h_new, None

    h0 = jnp.zeros((B, H), jnp.float32)
    h_last, _ = lax.scan(step, h0, jnp.transpose(x, (1, 0, 2)))
    return jnp.dot(h_last, w_fc_t, precision=hi) + b_fc


if __name__ == "__main__":
    key = jax.random.PRNGKey(0)
    k_x, k_p = jax.random.split(key)

    batch, seq = 2, 8
    x = jax.random.normal(k_x, (batch, seq, INPUT_SIZE), jnp.float32)
    params = init_params(k_p, INPUT_SIZE, HIDDEN_SIZE, NUM_CLASSES)

    out = jax.block_until_ready(rnn_forward(x, params))

    ref = reference_forward(x, params)
    assert out.shape == (batch, NUM_CLASSES)
    max_err = float(jnp.max(jnp.abs(out - ref)))
    # bf16 single-pass MXU vs full-f32 reference: allow bf16-level tolerance.
    assert max_err < 2e-2, f"mismatch vs reference: max |diff| = {max_err}"

    print("KERNEL_OK")
</pallas_src>

<mosaic_0001>
module attributes {stable_mosaic.version = 11 : i64} {
  func.func @rnn_kernel(%arg0: memref<2x8x8xf32, #tpu.memory_space<vmem>>, %arg1: memref<8x24xf32, #tpu.memory_space<vmem>>, %arg2: memref<24x24xf32, #tpu.memory_space<vmem>>, %arg3: memref<1x24xf32, #tpu.memory_space<vmem>>, %arg4: memref<24x10xf32, #tpu.memory_space<vmem>>, %arg5: memref<1x10xf32, #tpu.memory_space<vmem>>, %arg6: memref<2x10xf32, #tpu.memory_space<vmem>>) attributes {dimension_semantics = [], scalar_prefetch = 0 : i64, scratch_operands = 0 : i64, tpu.core_type = #tpu.core_type<tc>} {
    %c0 = arith.constant 0 : index
    %c0_0 = arith.constant 0 : index
    %0 = vector.load %arg1[%c0, %c0_0] : memref<8x24xf32, #tpu.memory_space<vmem>>, vector<8x24xf32>
    %1 = arith.truncf %0 : vector<8x24xf32> to vector<8x24xbf16>
    %c0_1 = arith.constant 0 : index
    %c0_2 = arith.constant 0 : index
    %2 = vector.load %arg2[%c0_1, %c0_2] : memref<24x24xf32, #tpu.memory_space<vmem>>, vector<24x24xf32>
    %3 = arith.truncf %2 : vector<24x24xf32> to vector<24x24xbf16>
    %c0_3 = arith.constant 0 : index
    %c0_4 = arith.constant 0 : index
    %4 = vector.load %arg4[%c0_3, %c0_4] : memref<24x10xf32, #tpu.memory_space<vmem>>, vector<24x10xf32>
    %5 = arith.truncf %4 : vector<24x10xf32> to vector<24x10xbf16>
    %c0_5 = arith.constant 0 : index
    %c0_6 = arith.constant 0 : index
    %6 = vector.load %arg3[%c0_5, %c0_6] : memref<1x24xf32, #tpu.memory_space<vmem>>, vector<1x24xf32>
    %c0_7 = arith.constant 0 : index
    %c0_8 = arith.constant 0 : index
    %c0_9 = arith.constant 0 : index
    %7 = vector.load %arg0[%c0_7, %c0_8, %c0_9] : memref<2x8x8xf32, #tpu.memory_space<vmem>>, vector<2x8x8xf32>
    %8 = vector.shape_cast %7 : vector<2x8x8xf32> to vector<16x8xf32>
    %9 = arith.truncf %8 : vector<16x8xf32> to vector<16x8xbf16>
    %cst = arith.constant dense<0.000000e+00> : vector<16x24xf32>
    %10 = tpu.matmul %9, %1, %cst {dimension_numbers = #tpu.dot_dimension_numbers<[1], [0], [0], [1], [0, 0, 1, 1], [], []>} : vector<16x8xbf16>, vector<8x24xbf16>, vector<16x24xf32> -> vector<16x24xf32>
    %11 = vector.broadcast %6 : vector<1x24xf32> to vector<16x24xf32>
    %12 = arith.addf %10, %11 : vector<16x24xf32>
    %13 = vector.shape_cast %12 : vector<16x24xf32> to vector<2x8x24xf32>
    %14 = vector.extract_strided_slice %13 {offsets = [0, 0, 0], sizes = [2, 1, 24], strides = [1, 1, 1]} : vector<2x8x24xf32> to vector<2x1x24xf32>
    %15 = vector.shape_cast %14 : vector<2x1x24xf32> to vector<2x24xf32>
    %16 = math.tanh %15 : vector<2x24xf32>
    %17 = arith.truncf %16 : vector<2x24xf32> to vector<2x24xbf16>
    %cst_10 = arith.constant dense<0.000000e+00> : vector<2x24xf32>
    %18 = tpu.matmul %17, %3, %cst_10 {dimension_numbers = #tpu.dot_dimension_numbers<[1], [0], [0], [1], [0, 0, 1, 1], [], []>} : vector<2x24xbf16>, vector<24x24xbf16>, vector<2x24xf32> -> vector<2x24xf32>
    %19 = vector.extract_strided_slice %13 {offsets = [0, 1, 0], sizes = [2, 1, 24], strides = [1, 1, 1]} : vector<2x8x24xf32> to vector<2x1x24xf32>
    %20 = vector.shape_cast %19 : vector<2x1x24xf32> to vector<2x24xf32>
    %21 = arith.addf %20, %18 : vector<2x24xf32>
    %22 = math.tanh %21 : vector<2x24xf32>
    %23 = arith.truncf %22 : vector<2x24xf32> to vector<2x24xbf16>
    %cst_11 = arith.constant dense<0.000000e+00> : vector<2x24xf32>
    %24 = tpu.matmul %23, %3, %cst_11 {dimension_numbers = #tpu.dot_dimension_numbers<[1], [0], [0], [1], [0, 0, 1, 1], [], []>} : vector<2x24xbf16>, vector<24x24xbf16>, vector<2x24xf32> -> vector<2x24xf32>
    %25 = vector.extract_strided_slice %13 {offsets = [0, 2, 0], sizes = [2, 1, 24], strides = [1, 1, 1]} : vector<2x8x24xf32> to vector<2x1x24xf32>
    %26 = vector.shape_cast %25 : vector<2x1x24xf32> to vector<2x24xf32>
    %27 = arith.addf %26, %24 : vector<2x24xf32>
    %28 = math.tanh %27 : vector<2x24xf32>
    %29 = arith.truncf %28 : vector<2x24xf32> to vector<2x24xbf16>
    %cst_12 = arith.constant dense<0.000000e+00> : vector<2x24xf32>
    %30 = tpu.matmul %29, %3, %cst_12 {dimension_numbers = #tpu.dot_dimension_numbers<[1], [0], [0], [1], [0, 0, 1, 1], [], []>} : vector<2x24xbf16>, vector<24x24xbf16>, vector<2x24xf32> -> vector<2x24xf32>
    %31 = vector.extract_strided_slice %13 {offsets = [0, 3, 0], sizes = [2, 1, 24], strides = [1, 1, 1]} : vector<2x8x24xf32> to vector<2x1x24xf32>
    %32 = vector.shape_cast %31 : vector<2x1x24xf32> to vector<2x24xf32>
    %33 = arith.addf %32, %30 : vector<2x24xf32>
    %34 = math.tanh %33 : vector<2x24xf32>
    %35 = arith.truncf %34 : vector<2x24xf32> to vector<2x24xbf16>
    %cst_13 = arith.constant dense<0.000000e+00> : vector<2x24xf32>
    %36 = tpu.matmul %35, %3, %cst_13 {dimension_numbers = #tpu.dot_dimension_numbers<[1], [0], [0], [1], [0, 0, 1, 1], [], []>} : vector<2x24xbf16>, vector<24x24xbf16>, vector<2x24xf32> -> vector<2x24xf32>
    %37 = vector.extract_strided_slice %13 {offsets = [0, 4, 0], sizes = [2, 1, 24], strides = [1, 1, 1]} : vector<2x8x24xf32> to vector<2x1x24xf32>
    %38 = vector.shape_cast %37 : vector<2x1x24xf32> to vector<2x24xf32>
    %39 = arith.addf %38, %36 : vector<2x24xf32>
    %40 = math.tanh %39 : vector<2x24xf32>
    %41 = arith.truncf %40 : vector<2x24xf32> to vector<2x24xbf16>
    %cst_14 = arith.constant dense<0.000000e+00> : vector<2x24xf32>
    %42 = tpu.matmul %41, %3, %cst_14 {dimension_numbers = #tpu.dot_dimension_numbers<[1], [0], [0], [1], [0, 0, 1, 1], [], []>} : vector<2x24xbf16>, vector<24x24xbf16>, vector<2x24xf32> -> vector<2x24xf32>
    %43 = vector.extract_strided_slice %13 {offsets = [0, 5, 0], sizes = [2, 1, 24], strides = [1, 1, 1]} : vector<2x8x24xf32> to vector<2x1x24xf32>
    %44 = vector.shape_cast %43 : vector<2x1x24xf32> to vector<2x24xf32>
    %45 = arith.addf %44, %42 : vector<2x24xf32>
    %46 = math.tanh %45 : vector<2x24xf32>
    %47 = arith.truncf %46 : vector<2x24xf32> to vector<2x24xbf16>
    %cst_15 = arith.constant dense<0.000000e+00> : vector<2x24xf32>
    %48 = tpu.matmul %47, %3, %cst_15 {dimension_numbers = #tpu.dot_dimension_numbers<[1], [0], [0], [1], [0, 0, 1, 1], [], []>} : vector<2x24xbf16>, vector<24x24xbf16>, vector<2x24xf32> -> vector<2x24xf32>
    %49 = vector.extract_strided_slice %13 {offsets = [0, 6, 0], sizes = [2, 1, 24], strides = [1, 1, 1]} : vector<2x8x24xf32> to vector<2x1x24xf32>
    %50 = vector.shape_cast %49 : vector<2x1x24xf32> to vector<2x24xf32>
    %51 = arith.addf %50, %48 : vector<2x24xf32>
    %52 = math.tanh %51 : vector<2x24xf32>
    %53 = arith.truncf %52 : vector<2x24xf32> to vector<2x24xbf16>
    %cst_16 = arith.constant dense<0.000000e+00> : vector<2x24xf32>
    %54 = tpu.matmul %53, %3, %cst_16 {dimension_numbers = #tpu.dot_dimension_numbers<[1], [0], [0], [1], [0, 0, 1, 1], [], []>} : vector<2x24xbf16>, vector<24x24xbf16>, vector<2x24xf32> -> vector<2x24xf32>
    %55 = vector.extract_strided_slice %13 {offsets = [0, 7, 0], sizes = [2, 1, 24], strides = [1, 1, 1]} : vector<2x8x24xf32> to vector<2x1x24xf32>
    %56 = vector.shape_cast %55 : vector<2x1x24xf32> to vector<2x24xf32>
    %57 = arith.addf %56, %54 : vector<2x24xf32>
    %58 = math.tanh %57 : vector<2x24xf32>
    %59 = arith.truncf %58 : vector<2x24xf32> to vector<2x24xbf16>
    %cst_17 = arith.constant dense<0.000000e+00> : vector<2x10xf32>
    %60 = tpu.matmul %59, %5, %cst_17 {dimension_numbers = #tpu.dot_dimension_numbers<[1], [0], [0], [1], [0, 0, 1, 1], [], []>} : vector<2x24xbf16>, vector<24x10xbf16>, vector<2x10xf32> -> vector<2x10xf32>
    %c0_18 = arith.constant 0 : index
    %c0_19 = arith.constant 0 : index
    %61 = vector.load %arg5[%c0_18, %c0_19] : memref<1x10xf32, #tpu.memory_space<vmem>>, vector<1x10xf32>
    %62 = vector.broadcast %61 : vector<1x10xf32> to vector<2x10xf32>
    %63 = arith.addf %60, %62 : vector<2x10xf32>
    %c0_20 = arith.constant 0 : index
    %c0_21 = arith.constant 0 : index
    %64 = vector.load %arg6[%c0_20, %c0_21] : memref<2x10xf32, #tpu.memory_space<vmem>>, vector<2x10xf32>
    tpu.vector_store %arg6[%c0_20, %c0_21], %63 {strides = array<i32>} : memref<2x10xf32, #tpu.memory_space<vmem>>, vector<2x10xf32>,
    return
  }
}

</mosaic_0001>

<llo_original>
// kernel: tpu_custom_call.1
$region0: #{tpu_custom_call.1}
  #allocation0 [shape = 'u32[]', space=smem, size = 0x4, offset = 0x4, fixed_abs, tag = 'smem constant byte address 0x4 - core index']
  #allocation1 [shape = 'u32[144,128]{1,0:T(1,128)}', space=vmem, size = 0x12000, scoped, tag = 'internal scratch']
  %s0 = inlined_call_operand.vmem [shape: f32[2,8,8], index: 0, kind: input, shape index: {}]
  %s1 = inlined_call_operand.hbm [shape: f32[8,24], index: 1, kind: input, shape index: {}]
  %s2 = inlined_call_operand.vmem [shape: f32[24,24], index: 2, kind: input, shape index: {}]
  %s3 = inlined_call_operand.vmem [shape: f32[1,24], index: 3, kind: input, shape index: {}]
  %s4 = inlined_call_operand.vmem [shape: f32[24,10], index: 4, kind: input, shape index: {}]
  %s5 = inlined_call_operand.vmem [shape: f32[1,10], index: 5, kind: input, shape index: {}]
  %s6 = inlined_call_operand.hbm [shape: f32[2,10], index: 6, kind: output, shape index: {}]
  %s7 = sld [smem:[#allocation0]]
  $region38: #{tpu_custom_call.1} parent=0
    _
  %s9 = ssub.s32 1, %s7
  %s10 = scalar_select 0, %s9, %s7
  $region1: #{tpu_custom_call.1} parent=0
    #allocation2 [shape = 'u8[4096]{0}', space=vmem, size = 0x1000, scoped, tag = 'input window, operand 1, single buffered']
    #allocation3 [shape = 's32[1]{0}', space=sflag, size = 0x4, scoped, tag = 'scoped memory for tpu_custom_call.1']
    #allocation4 [shape = 's32[1]{0}', space=sflag, size = 0x4, scoped, tag = 'scoped memory for tpu_custom_call.1']
    #allocation5 [shape = 'u8[1024]{0}', space=vmem, size = 0x400, scoped, tag = 'output window, operand 0, single buffered']
    %11 = vsyncpa [#allocation3], 0
    %12 = vsyncpa [#allocation4], 0
    // Predicated region
    $region2: #{tpu_custom_call.1} parent=1 // pred_check
      _
    $region3: #{tpu_custom_call.1} parent=1 // pred_check_branch
      %14 = sbr.rel (0) target = $region5
    $region4: #{tpu_custom_call.1} parent=1 // pred_region
      _
    $region5: #{tpu_custom_call.1} parent=1 // pred_fallthru
      _
    // Predicated region
    $region6: #{tpu_custom_call.1} parent=1 // pred_check
      _
    $region7: #{tpu_custom_call.1} parent=1 // pred_check_branch
      %16 = sbr.rel (0) target = $region9
    $region8: #{tpu_custom_call.1} parent=1 // pred_region
      %s18 = ssub.s32 128, 128
      %19 = vsyncadd [#allocation3], %s18
      %s21 = sshll.u32 [#allocation2], 4
      %s22 = int_to_ptr.vmem [resolvable:$true] %s21
      %24 = dma.hbm_to_vmem [thread:$0]  %s1, 128, %s22, [#allocation3]
    $region9: #{tpu_custom_call.1} parent=1 // pred_fallthru
      _
    // Predicated region
    $region10: #{tpu_custom_call.1} parent=1 // pred_check
      _
    $region11: #{tpu_custom_call.1} parent=1 // pred_check_branch
      %26 = sbr.rel (0) target = $region13
    $region12: #{tpu_custom_call.1} parent=1 // pred_region
      _
    $region13: #{tpu_custom_call.1} parent=1 // pred_fallthru
      _
    // Predicated region
    $region14: #{tpu_custom_call.1} parent=1 // pred_check
      _
    $region15: #{tpu_custom_call.1} parent=1 // pred_check_branch
      %28 = sbr.rel (0) target = $region17
    $region16: #{tpu_custom_call.1} parent=1 // pred_region
      _
    $region17: #{tpu_custom_call.1} parent=1 // pred_fallthru
      _
    // Predicated region
    $region18: #{tpu_custom_call.1} parent=1 // pred_check
      _
    $region19: #{tpu_custom_call.1} parent=1 // pred_check_branch
      %30 = sbr.rel (0) target = $region21
    $region20: #{tpu_custom_call.1} parent=1 // pred_region
      _
    $region21: #{tpu_custom_call.1} parent=1 // pred_fallthru
      _
    // Predicated region
    $region22: #{tpu_custom_call.1} parent=1 // pred_check
      _
    $region23: #{tpu_custom_call.1} parent=1 // pred_check_branch
      %32 = sbr.rel (0) target = $region25
    $region24: #{tpu_custom_call.1} parent=1 // pred_region
      _
    $region25: #{tpu_custom_call.1} parent=1 // pred_fallthru
      _
    // Predicated region
    $region26: #{tpu_custom_call.1} parent=1 // pred_check
      _
    $region27: #{tpu_custom_call.1} parent=1 // pred_check_branch
      %34 = sbr.rel (0) target = $region29
    $region28: #{tpu_custom_call.1} parent=1 // pred_region
      %35 = dma.done [#allocation3], 128
    $region29: #{tpu_custom_call.1} parent=1 // pred_fallthru
      _
    %v37 = vld [vmem:[#allocation2] sm:$0xff]
    %v38 = vpack.c.bf16 %v37, %v37
    %v39 = vld [vmem:[%s2] sm:$0xff]
    %v40 = vld [vmem:[%s2 + $0x8] sm:$0xff]
    %v41 = vld [vmem:[%s2 + $0x10] sm:$0xff]
    %v42 = vpack.c.bf16 %v40, %v39
    %v43 = vpack.c.bf16 %v41, %v41
    %v44 = vld [vmem:[%s4] sm:$0xff]
    %v45 = vld [vmem:[%s4 + $0x8] sm:$0xff]
    %v46 = vld [vmem:[%s4 + $0x10] sm:$0xff]
    %v47 = vpack.c.bf16 %v45, %v44
    %v48 = vpack.c.bf16 %v46, %v46
    %v49 = vld [vmem:[%s3] sm:$0x1]
    %v50 = vld [vmem:[%s0] sm:$0xff]
    %v51 = vld [vmem:[%s0 + $0x8] sm:$0xff]
    %v52 = vpack.c.bf16 %v51, %v50
    %v54 = vlaneseq
    %v55 = vshrl.u32 %v54, 7
    %v56 = vsub.s32 0, %v55
    %v57 = vrot.slane %v49, %v56
    %vm59 = vcmask 64512
    %v61 = vsel %vm59, %v52, 0
    %vm63 = vcmask 1043456
    %v65 = vsel %vm63, %v38, 0
    %67 = vmatprep.subr.bf16.mxu0 0
    %68 = vmatpush1.bf16.msra.mxu0 %v65
    %69 = vmatprep.subr.bf16.mxu0 0
    %70 = vmatpush1.bf16.msra.mxu0 0
    %71 = vmatprep.subr.bf16.mxu0 0
    %72 = vmatpush1.bf16.msra.mxu0 0
    %73 = vmatprep.subr.bf16.mxu0 0
    %74 = vmatpush1.bf16.msra.mxu0 0
    %75 = vmatprep.subr.bf16.mxu0 0
    %76 = vmatpush1.bf16.msra.mxu0 0
    %77 = vmatprep.subr.bf16.mxu0 0
    %78 = vmatpush1.bf16.msra.mxu0 0
    %79 = vmatprep.subr.bf16.mxu0 0
    %80 = vmatpush1.bf16.msra.mxu0 0
    %81 = vmatprep.subr.bf16.mxu0 0
    %82 = vmatpush1.bf16.msra.mxu0 0
    %83 = vmatprep.subr.bf16.mxu0 0
    %84 = vmatpush1.bf16.msra.mxu0 0
    %85 = vmatprep.subr.bf16.mxu0 0
    %86 = vmatpush1.bf16.msra.mxu0 0
    %87 = vmatprep.subr.bf16.mxu0 0
    %88 = vmatpush1.bf16.msra.mxu0 0
    %89 = vmatprep.subr.bf16.mxu0 0
    %90 = vmatpush1.bf16.msra.mxu0 0
    %91 = vmatprep.subr.bf16.mxu0 0
    %92 = vmatpush1.bf16.msra.mxu0 0
    %93 = vmatprep.subr.bf16.mxu0 0
    %94 = vmatpush1.bf16.msra.mxu0 0
    %95 = vmatprep.subr.bf16.mxu0 0
    %96 = vmatpush1.bf16.msra.mxu0 0
    %97 = vmatprep.subr.bf16.mxu0 0
    %98 = vmatpush1.bf16.msra.mxu0 0
    %99 = vmatprep.mubr.bf16.mxu0 0
    %100 = vmatmul.mubr.bf16.gmra.mrb[0].mxu0 %v61
    %v101 = vpop.f32.mrb[0].mxu0
    %v102 = vadd.f32 %v57, %v101
    %v103 = vpop.f32.mrb[0].mxu0
    %v104 = vpop.f32.mrb[0].mxu0
    %v105 = vadd.f32 %v57, %v104
    %v106 = vpop.f32.mrb[0].mxu0
    %107 = vdwg.mxu0
    %v108 = vtanh.pop %v102
    %v109 = vtanh.pop %v105
    %v110 = vpack.c.bf16 %v108, %v108
    %v111 = vpack.c.bf16 %v109, %v109
    %v114 = vunpack.c.l.b16 %v110
    %v115 = vunpack.c.l.b16 %v111
    %v116 = vrot.slane %v115, 7
    %vm117 = vcmask 1041409
    %v118 = vsel %vm117, %v116, %v114
    %v119 = vpack.c.b16 %v118, %v118
    %vm120 = vcmask 195584
    %v122 = vsel %vm120, %v119, 0
    %v125 = vsel %vm63, %v43, 0
    %127 = vmatprep.subr.bf16.mxu0 0
    %128 = vmatpush1.bf16.msra.mxu0 %v42
    %129 = vmatprep.subr.bf16.mxu0 0
    %130 = vmatpush1.bf16.msra.mxu0 %v125
    %131 = vmatprep.subr.bf16.mxu0 0
    %132 = vmatpush1.bf16.msra.mxu0 0
    %133 = vmatprep.subr.bf16.mxu0 0
    %134 = vmatpush1.bf16.msra.mxu0 0
    %135 = vmatprep.subr.bf16.mxu0 0
    %136 = vmatpush1.bf16.msra.mxu0 0
    %137 = vmatprep.subr.bf16.mxu0 0
    %138 = vmatpush1.bf16.msra.mxu0 0
    %139 = vmatprep.subr.bf16.mxu0 0
    %140 = vmatpush1.bf16.msra.mxu0 0
    %141 = vmatprep.subr.bf16.mxu0 0
    %142 = vmatpush1.bf16.msra.mxu0 0
    %143 = vmatprep.subr.bf16.mxu0 0
    %144 = vmatpush1.bf16.msra.mxu0 0
    %145 = vmatprep.subr.bf16.mxu0 0
    %146 = vmatpush1.bf16.msra.mxu0 0
    %147 = vmatprep.subr.bf16.mxu0 0
    %148 = vmatpush1.bf16.msra.mxu0 0
    %149 = vmatprep.subr.bf16.mxu0 0
    %150 = vmatpush1.bf16.msra.mxu0 0
    %151 = vmatprep.subr.bf16.mxu0 0
    %152 = vmatpush1.bf16.msra.mxu0 0
    %153 = vmatprep.subr.bf16.mxu0 0
    %154 = vmatpush1.bf16.msra.mxu0 0
    %155 = vmatprep.subr.bf16.mxu0 0
    %156 = vmatpush1.bf16.msra.mxu0 0
    %157 = vmatprep.subr.bf16.mxu0 0
    %158 = vmatpush1.bf16.msra.mxu0 0
    %159 = vmatprep.mubr.bf16.mxu0 0
    %160 = vmatmul.mubr.bf16.gmra.mrb[0].mxu0 %v122
    %v161 = vpop.f32.mrb[0].mxu0
    %v162 = vadd.f32 0.0, %v161
    %v163 = vpop.f32.mrb[0].mxu0
    %v164 = vpop.f32.mrb[0].mxu0
    %v165 = vpop.f32.mrb[0].mxu0
    %166 = vdwg.mxu0
    %v168 = vrot.slane %v162, 7
    %v171 = vadd.f32 %v102, %v168
    %v172 = vadd.f32 %v105, %v162
    %v173 = vtanh.pop %v171
    %v174 = vtanh.pop %v172
    %v175 = vpack.c.bf16 %v173, %v173
    %v176 = vpack.c.bf16 %v174, %v174
    %v179 = vunpack.c.l.b16 %v175
    %v180 = vunpack.c.l.b16 %v176
    %v181 = vrot.slane %v179, 1
    %v182 = vsel %vm117, %v180, %v181
    %v183 = vpack.c.b16 %v182, %v182
    %v185 = vsel %vm120, %v183, 0
    %187 = vmatprep.subr.bf16.mxu0 0
    %188 = vmatpush1.bf16.msra.mxu0 %v42
    %189 = vmatprep.subr.bf16.mxu0 0
    %190 = vmatpush1.bf16.msra.mxu0 %v125
    %191 = vmatprep.subr.bf16.mxu0 0
    %192 = vmatpush1.bf16.msra.mxu0 0
    %193 = vmatprep.subr.bf16.mxu0 0
    %194 = vmatpush1.bf16.msra.mxu0 0
    %195 = vmatprep.subr.bf16.mxu0 0
    %196 = vmatpush1.bf16.msra.mxu0 0
    %197 = vmatprep.subr.bf16.mxu0 0
    %198 = vmatpush1.bf16.msra.mxu0 0
    %199 = vmatprep.subr.bf16.mxu0 0
    %200 = vmatpush1.bf16.msra.mxu0 0
    %201 = vmatprep.subr.bf16.mxu0 0
    %202 = vmatpush1.bf16.msra.mxu0 0
    %203 = vmatprep.subr.bf16.mxu0 0
    %204 = vmatpush1.bf16.msra.mxu0 0
    %205 = vmatprep.subr.bf16.mxu0 0
    %206 = vmatpush1.bf16.msra.mxu0 0
    %207 = vmatprep.subr.bf16.mxu0 0
    %208 = vmatpush1.bf16.msra.mxu0 0
    %209 = vmatprep.subr.bf16.mxu0 0
    %210 = vmatpush1.bf16.msra.mxu0 0
    %211 = vmatprep.subr.bf16.mxu0 0
    %212 = vmatpush1.bf16.msra.mxu0 0
    %213 = vmatprep.subr.bf16.mxu0 0
    %214 = vmatpush1.bf16.msra.mxu0 0
    %215 = vmatprep.subr.bf16.mxu0 0
    %216 = vmatpush1.bf16.msra.mxu0 0
    %217 = vmatprep.subr.bf16.mxu0 0
    %218 = vmatpush1.bf16.msra.mxu0 0
    %219 = vmatprep.mubr.bf16.mxu0 0
    %220 = vmatmul.mubr.bf16.gmra.mrb[0].mxu0 %v185
    %v221 = vpop.f32.mrb[0].mxu0
    %v222 = vadd.f32 0.0, %v221
    %v223 = vpop.f32.mrb[0].mxu0
    %v224 = vpop.f32.mrb[0].mxu0
    %v225 = vpop.f32.mrb[0].mxu0
    %226 = vdwg.mxu0
    %v228 = vrot.slane %v222, 6
    %v229 = vrot.slane %v222, 7
    %v232 = vadd.f32 %v102, %v228
    %v233 = vadd.f32 %v105, %v229
    %v234 = vtanh.pop %v232
    %v235 = vtanh.pop %v233
    %v236 = vpack.c.bf16 %v234, %v234
    %v237 = vpack.c.bf16 %v235, %v235
    %v240 = vunpack.c.l.b16 %v236
    %v241 = vunpack.c.l.b16 %v237
    %v242 = vrot.slane %v240, 2
    %v243 = vrot.slane %v241, 1
    %v244 = vsel %vm117, %v243, %v242
    %v245 = vpack.c.b16 %v244, %v244
    %v247 = vsel %vm120, %v245, 0
    %249 = vmatprep.subr.bf16.mxu0 0
    %250 = vmatpush1.bf16.msra.mxu0 %v42
    %251 = vmatprep.subr.bf16.mxu0 0
    %252 = vmatpush1.bf16.msra.mxu0 %v125
    %253 = vmatprep.subr.bf16.mxu0 0
    %254 = vmatpush1.bf16.msra.mxu0 0
    %255 = vmatprep.subr.bf16.mxu0 0
    %256 = vmatpush1.bf16.msra.mxu0 0
    %257 = vmatprep.subr.bf16.mxu0 0
    %258 = vmatpush1.bf16.msra.mxu0 0
    %259 = vmatprep.subr.bf16.mxu0 0
    %260 = vmatpush1.bf16.msra.mxu0 0
    %261 = vmatprep.subr.bf16.mxu0 0
    %262 = vmatpush1.bf16.msra.mxu0 0
    %263 = vmatprep.subr.bf16.mxu0 0
    %264 = vmatpush1.bf16.msra.mxu0 0
    %265 = vmatprep.subr.bf16.mxu0 0
    %266 = vmatpush1.bf16.msra.mxu0 0
    %267 = vmatprep.subr.bf16.mxu0 0
    %268 = vmatpush1.bf16.msra.mxu0 0
    %269 = vmatprep.subr.bf16.mxu0 0
    %270 = vmatpush1.bf16.msra.mxu0 0
    %271 = vmatprep.subr.bf16.mxu0 0
    %272 = vmatpush1.bf16.msra.mxu0 0
    %273 = vmatprep.subr.bf16.mxu0 0
    %274 = vmatpush1.bf16.msra.mxu0 0
    %275 = vmatprep.subr.bf16.mxu0 0
    %276 = vmatpush1.bf16.msra.mxu0 0
    %277 = vmatprep.subr.bf16.mxu0 0
    %278 = vmatpush1.bf16.msra.mxu0 0
    %279 = vmatprep.subr.bf16.mxu0 0
    %280 = vmatpush1.bf16.msra.mxu0 0
    %281 = vmatprep.mubr.bf16.mxu0 0
    %282 = vmatmul.mubr.bf16.gmra.mrb[0].mxu0 %v247
    %v283 = vpop.f32.mrb[0].mxu0
    %v284 = vadd.f32 0.0, %v283
    %v285 = vpop.f32.mrb[0].mxu0
    %v286 = vpop.f32.mrb[0].mxu0
    %v287 = vpop.f32.mrb[0].mxu0
    %288 = vdwg.mxu0
    %v290 = vrot.slane %v284, 5
    %v291 = vrot.slane %v284, 6
    %v294 = vadd.f32 %v102, %v290
    %v295 = vadd.f32 %v105, %v291
    %v296 = vtanh.pop %v294
    %v297 = vtanh.pop %v295
    %v298 = vpack.c.bf16 %v296, %v296
    %v299 = vpack.c.bf16 %v297, %v297
    %v302 = vunpack.c.l.b16 %v298
    %v303 = vunpack.c.l.b16 %v299
    %v304 = vrot.slane %v302, 3
    %v305 = vrot.slane %v303, 2
    %v306 = vsel %vm117, %v305, %v304
    %v307 = vpack.c.b16 %v306, %v306
    %v309 = vsel %vm120, %v307, 0
    %311 = vmatprep.subr.bf16.mxu0 0
    %312 = vmatpush1.bf16.msra.mxu0 %v42
    %313 = vmatprep.subr.bf16.mxu0 0
    %314 = vmatpush1.bf16.msra.mxu0 %v125
    %315 = vmatprep.subr.bf16.mxu0 0
    %316 = vmatpush1.bf16.msra.mxu0 0
    %317 = vmatprep.subr.bf16.mxu0 0
    %318 = vmatpush1.bf16.msra.mxu0 0
    %319 = vmatprep.subr.bf16.mxu0 0
    %320 = vmatpush1.bf16.msra.mxu0 0
    %321 = vmatprep.subr.bf16.mxu0 0
    %322 = vmatpush1.bf16.msra.mxu0 0
    %323 = vmatprep.subr.bf16.mxu0 0
    %324 = vmatpush1.bf16.msra.mxu0 0
    %325 = vmatprep.subr.bf16.mxu0 0
    %326 = vmatpush1.bf16.msra.mxu0 0
    %327 = vmatprep.subr.bf16.mxu0 0
    %328 = vmatpush1.bf16.msra.mxu0 0
    %329 = vmatprep.subr.bf16.mxu0 0
    %330 = vmatpush1.bf16.msra.mxu0 0
    %331 = vmatprep.subr.bf16.mxu0 0
    %332 = vmatpush1.bf16.msra.mxu0 0
    %333 = vmatprep.subr.bf16.mxu0 0
    %334 = vmatpush1.bf16.msra.mxu0 0
    %335 = vmatprep.subr.bf16.mxu0 0
    %336 = vmatpush1.bf16.msra.mxu0 0
    %337 = vmatprep.subr.bf16.mxu0 0
    %338 = vmatpush1.bf16.msra.mxu0 0
    %339 = vmatprep.subr.bf16.mxu0 0
    %340 = vmatpush1.bf16.msra.mxu0 0
    %341 = vmatprep.subr.bf16.mxu0 0
    %342 = vmatpush1.bf16.msra.mxu0 0
    %343 = vmatprep.mubr.bf16.mxu0 0
    %344 = vmatmul.mubr.bf16.gmra.mrb[0].mxu0 %v309
    %v345 = vpop.f32.mrb[0].mxu0
    %v346 = vadd.f32 0.0, %v345
    %v347 = vpop.f32.mrb[0].mxu0
    %v348 = vpop.f32.mrb[0].mxu0
    %v349 = vpop.f32.mrb[0].mxu0
    %350 = vdwg.mxu0
    %v352 = vrot.slane %v346, 4
    %v353 = vrot.slane %v346, 5
    %v356 = vadd.f32 %v102, %v352
    %v357 = vadd.f32 %v105, %v353
    %v358 = vtanh.pop %v356
    %v359 = vtanh.pop %v357
    %v360 = vpack.c.bf16 %v358, %v358
    %v361 = vpack.c.bf16 %v359, %v359
    %v364 = vunpack.c.l.b16 %v360
    %v365 = vunpack.c.l.b16 %v361
    %v366 = vrot.slane %v364, 4
    %v367 = vrot.slane %v365, 3
    %v368 = vsel %vm117, %v367, %v366
    %v369 = vpack.c.b16 %v368, %v368
    %v371 = vsel %vm120, %v369, 0
    %373 = vmatprep.subr.bf16.mxu0 0
    %374 = vmatpush1.bf16.msra.mxu0 %v42
    %375 = vmatprep.subr.bf16.mxu0 0
    %376 = vmatpush1.bf16.msra.mxu0 %v125
    %377 = vmatprep.subr.bf16.mxu0 0
    %378 = vmatpush1.bf16.msra.mxu0 0
    %379 = vmatprep.subr.bf16.mxu0 0
    %380 = vmatpush1.bf16.msra.mxu0 0
    %381 = vmatprep.subr.bf16.mxu0 0
    %382 = vmatpush1.bf16.msra.mxu0 0
    %383 = vmatprep.subr.bf16.mxu0 0
    %384 = vmatpush1.bf16.msra.mxu0 0
    %385 = vmatprep.subr.bf16.mxu0 0
    %386 = vmatpush1.bf16.msra.mxu0 0
    %387 = vmatprep.subr.bf16.mxu0 0
    %388 = vmatpush1.bf16.msra.mxu0 0
    %389 = vmatprep.subr.bf16.mxu0 0
    %390 = vmatpush1.bf16.msra.mxu0 0
    %391 = vmatprep.subr.bf16.mxu0 0
    %392 = vmatpush1.bf16.msra.mxu0 0
    %393 = vmatprep.subr.bf16.mxu0 0
    %394 = vmatpush1.bf16.msra.mxu0 0
    %395 = vmatprep.subr.bf16.mxu0 0
    %396 = vmatpush1.bf16.msra.mxu0 0
    %397 = vmatprep.subr.bf16.mxu0 0
    %398 = vmatpush1.bf16.msra.mxu0 0
    %399 = vmatprep.subr.bf16.mxu0 0
    %400 = vmatpush1.bf16.msra.mxu0 0
    %401 = vmatprep.subr.bf16.mxu0 0
    %402 = vmatpush1.bf16.msra.mxu0 0
    %403 = vmatprep.subr.bf16.mxu0 0
    %404 = vmatpush1.bf16.msra.mxu0 0
    %405 = vmatprep.mubr.bf16.mxu0 0
    %406 = vmatmul.mubr.bf16.gmra.mrb[0].mxu0 %v371
    %v407 = vpop.f32.mrb[0].mxu0
    %v408 = vadd.f32 0.0, %v407
    %v409 = vpop.f32.mrb[0].mxu0
    %v410 = vpop.f32.mrb[0].mxu0
    %v411 = vpop.f32.mrb[0].mxu0
    %412 = vdwg.mxu0
    %v414 = vrot.slane %v408, 3
    %v415 = vrot.slane %v408, 4
    %v418 = vadd.f32 %v102, %v414
    %v419 = vadd.f32 %v105, %v415
    %v420 = vtanh.pop %v418
    %v421 = vtanh.pop %v419
    %v422 = vpack.c.bf16 %v420, %v420
    %v423 = vpack.c.bf16 %v421, %v421
    %v426 = vunpack.c.l.b16 %v422
    %v427 = vunpack.c.l.b16 %v423
    %v428 = vrot.slane %v426, 5
    %v429 = vrot.slane %v427, 4
    %v430 = vsel %vm117, %v429, %v428
    %v431 = vpack.c.b16 %v430, %v430
    %v433 = vsel %vm120, %v431, 0
    %435 = vmatprep.subr.bf16.mxu0 0
    %436 = vmatpush1.bf16.msra.mxu0 %v42
    %437 = vmatprep.subr.bf16.mxu0 0
    %438 = vmatpush1.bf16.msra.mxu0 %v125
    %439 = vmatprep.subr.bf16.mxu0 0
    %440 = vmatpush1.bf16.msra.mxu0 0
    %441 = vmatprep.subr.bf16.mxu0 0
    %442 = vmatpush1.bf16.msra.mxu0 0
    %443 = vmatprep.subr.bf16.mxu0 0
    %444 = vmatpush1.bf16.msra.mxu0 0
    %445 = vmatprep.subr.bf16.mxu0 0
    %446 = vmatpush1.bf16.msra.mxu0 0
    %447 = vmatprep.subr.bf16.mxu0 0
    %448 = vmatpush1.bf16.msra.mxu0 0
    %449 = vmatprep.subr.bf16.mxu0 0
    %450 = vmatpush1.bf16.msra.mxu0 0
    %451 = vmatprep.subr.bf16.mxu0 0
    %452 = vmatpush1.bf16.msra.mxu0 0
    %453 = vmatprep.subr.bf16.mxu0 0
    %454 = vmatpush1.bf16.msra.mxu0 0
    %455 = vmatprep.subr.bf16.mxu0 0
    %456 = vmatpush1.bf16.msra.mxu0 0
    %457 = vmatprep.subr.bf16.mxu0 0
    %458 = vmatpush1.bf16.msra.mxu0 0
    %459 = vmatprep.subr.bf16.mxu0 0
    %460 = vmatpush1.bf16.msra.mxu0 0
    %461 = vmatprep.subr.bf16.mxu0 0
    %462 = vmatpush1.bf16.msra.mxu0 0
    %463 = vmatprep.subr.bf16.mxu0 0
    %464 = vmatpush1.bf16.msra.mxu0 0
    %465 = vmatprep.subr.bf16.mxu0 0
    %466 = vmatpush1.bf16.msra.mxu0 0
    %467 = vmatprep.mubr.bf16.mxu0 0
    %468 = vmatmul.mubr.bf16.gmra.mrb[0].mxu0 %v433
    %v469 = vpop.f32.mrb[0].mxu0
    %v470 = vadd.f32 0.0, %v469
    %v471 = vpop.f32.mrb[0].mxu0
    %v472 = vpop.f32.mrb[0].mxu0
    %v473 = vpop.f32.mrb[0].mxu0
    %474 = vdwg.mxu0
    %v476 = vrot.slane %v470, 2
    %v477 = vrot.slane %v470, 3
    %v480 = vadd.f32 %v102, %v476
    %v481 = vadd.f32 %v105, %v477
    %v482 = vtanh.pop %v480
    %v483 = vtanh.pop %v481
    %v484 = vpack.c.bf16 %v482, %v482
    %v485 = vpack.c.bf16 %v483, %v483
    %v488 = vunpack.c.l.b16 %v484
    %v489 = vunpack.c.l.b16 %v485
    %v490 = vrot.slane %v488, 6
    %v491 = vrot.slane %v489, 5
    %v492 = vsel %vm117, %v491, %v490
    %v493 = vpack.c.b16 %v492, %v492
    %v495 = vsel %vm120, %v493, 0
    %497 = vmatprep.subr.bf16.mxu0 0
    %498 = vmatpush1.bf16.msra.mxu0 %v42
    %499 = vmatprep.subr.bf16.mxu0 0
    %500 = vmatpush1.bf16.msra.mxu0 %v125
    %501 = vmatprep.subr.bf16.mxu0 0
    %502 = vmatpush1.bf16.msra.mxu0 0
    %503 = vmatprep.subr.bf16.mxu0 0
    %504 = vmatpush1.bf16.msra.mxu0 0
    %505 = vmatprep.subr.bf16.mxu0 0
    %506 = vmatpush1.bf16.msra.mxu0 0
    %507 = vmatprep.subr.bf16.mxu0 0
    %508 = vmatpush1.bf16.msra.mxu0 0
    %509 = vmatprep.subr.bf16.mxu0 0
    %510 = vmatpush1.bf16.msra.mxu0 0
    %511 = vmatprep.subr.bf16.mxu0 0
    %512 = vmatpush1.bf16.msra.mxu0 0
    %513 = vmatprep.subr.bf16.mxu0 0
    %514 = vmatpush1.bf16.msra.mxu0 0
    %515 = vmatprep.subr.bf16.mxu0 0
    %516 = vmatpush1.bf16.msra.mxu0 0
    %517 = vmatprep.subr.bf16.mxu0 0
    %518 = vmatpush1.bf16.msra.mxu0 0
    %519 = vmatprep.subr.bf16.mxu0 0
    %520 = vmatpush1.bf16.msra.mxu0 0
    %521 = vmatprep.subr.bf16.mxu0 0
    %522 = vmatpush1.bf16.msra.mxu0 0
    %523 = vmatprep.subr.bf16.mxu0 0
    %524 = vmatpush1.bf16.msra.mxu0 0
    %525 = vmatprep.subr.bf16.mxu0 0
    %526 = vmatpush1.bf16.msra.mxu0 0
    %527 = vmatprep.subr.bf16.mxu0 0
    %528 = vmatpush1.bf16.msra.mxu0 0
    %529 = vmatprep.mubr.bf16.mxu0 0
    %530 = vmatmul.mubr.bf16.gmra.mrb[0].mxu0 %v495
    %v531 = vpop.f32.mrb[0].mxu0
    %v532 = vadd.f32 0.0, %v531
    %v533 = vpop.f32.mrb[0].mxu0
    %v534 = vpop.f32.mrb[0].mxu0
    %v535 = vpop.f32.mrb[0].mxu0
    %536 = vdwg.mxu0
    %v538 = vrot.slane %v532, 1
    %v539 = vrot.slane %v532, 2
    %v542 = vadd.f32 %v102, %v538
    %v543 = vadd.f32 %v105, %v539
    %v544 = vtanh.pop %v542
    %v545 = vtanh.pop %v543
    %v546 = vpack.c.bf16 %v544, %v544
    %v547 = vpack.c.bf16 %v545, %v545
    %v548 = vld [vmem:[%s5] sm:$0x1]
    %v550 = vlaneseq
    %v551 = vshrl.u32 %v550, 7
    %v552 = vsub.s32 0, %v551
    %v553 = vrot.slane %v548, %v552
    %v557 = vunpack.c.l.b16 %v546
    %v558 = vunpack.c.l.b16 %v547
    %v559 = vrot.slane %v557, 7
    %v560 = vrot.slane %v558, 6
    %v561 = vsel %vm117, %v560, %v559
    %v562 = vpack.c.b16 %v561, %v561
    %v564 = vsel %vm120, %v562, 0
    %v567 = vsel %vm63, %v48, 0
    %569 = vmatprep.subr.bf16.mxu0 0
    %570 = vmatpush1.bf16.msra.mxu0 %v47
    %571 = vmatprep.subr.bf16.mxu0 0
    %572 = vmatpush1.bf16.msra.mxu0 %v567
    %573 = vmatprep.subr.bf16.mxu0 0
    %574 = vmatpush1.bf16.msra.mxu0 0
    %575 = vmatprep.subr.bf16.mxu0 0
    %576 = vmatpush1.bf16.msra.mxu0 0
    %577 = vmatprep.subr.bf16.mxu0 0
    %578 = vmatpush1.bf16.msra.mxu0 0
    %579 = vmatprep.subr.bf16.mxu0 0
    %580 = vmatpush1.bf16.msra.mxu0 0
    %581 = vmatprep.subr.bf16.mxu0 0
    %582 = vmatpush1.bf16.msra.mxu0 0
    %583 = vmatprep.subr.bf16.mxu0 0
    %584 = vmatpush1.bf16.msra.mxu0 0
    %585 = vmatprep.subr.bf16.mxu0 0
    %586 = vmatpush1.bf16.msra.mxu0 0
    %587 = vmatprep.subr.bf16.mxu0 0
    %588 = vmatpush1.bf16.msra.mxu0 0
    %589 = vmatprep.subr.bf16.mxu0 0
    %590 = vmatpush1.bf16.msra.mxu0 0
    %591 = vmatprep.subr.bf16.mxu0 0
    %592 = vmatpush1.bf16.msra.mxu0 0
    %593 = vmatprep.subr.bf16.mxu0 0
    %594 = vmatpush1.bf16.msra.mxu0 0
    %595 = vmatprep.subr.bf16.mxu0 0
    %596 = vmatpush1.bf16.msra.mxu0 0
    %597 = vmatprep.subr.bf16.mxu0 0
    %598 = vmatpush1.bf16.msra.mxu0 0
    %599 = vmatprep.subr.bf16.mxu0 0
    %600 = vmatpush1.bf16.msra.mxu0 0
    %601 = vmatprep.mubr.bf16.mxu0 0
    %602 = vmatmul.mubr.bf16.gmra.mrb[0].mxu0 %v564
    %v603 = vpop.f32.mrb[0].mxu0
    %v604 = vadd.f32 %v553, %v603
    %v605 = vpop.f32.mrb[0].mxu0
    %v606 = vpop.f32.mrb[0].mxu0
    %v607 = vpop.f32.mrb[0].mxu0
    %608 = vdwg.mxu0
    %vm609 = vcmask 74752
    %610 = vst.msk [vmem:[#allocation5] sm:$0x3] %vm609, %v604
    // Predicated region
    $region30: #{tpu_custom_call.1} parent=1 // pred_check
      _
    $region31: #{tpu_custom_call.1} parent=1 // pred_check_branch
      %612 = sbr.rel (0) target = $region33
    $region32: #{tpu_custom_call.1} parent=1 // pred_region
      %s614 = ssub.s32 32, 32
      %615 = vsyncadd [#allocation4], %s614
      %s617 = sshll.u32 [#allocation5], 4
      %s618 = int_to_ptr.vmem [resolvable:$true] %s617
      %620 = dma.vmem_to_hbm [thread:$0]  %s618, 32, %s6, [#allocation4]
    $region33: #{tpu_custom_call.1} parent=1 // pred_fallthru
      _
    // Predicated region
    $region34: #{tpu_custom_call.1} parent=1 // pred_check
      _
    $region35: #{tpu_custom_call.1} parent=1 // pred_check_branch
      %622 = sbr.rel (0) target = $region37
    $region36: #{tpu_custom_call.1} parent=1 // pred_region
      %623 = dma.done [#allocation4], 32
    $region37: #{tpu_custom_call.1} parent=1 // pred_fallthru
      _
    %624 = vsyncpa [#allocation3], 1
    %625 = vsyncpa [#allocation4], 1

</llo_original>
